<compile_context>
chip_gen: v7x
topology: tpu7x:2x2x1
jax: 0.10.0
libtpu: 0.0.40
codegen_flags: <defaults>
</compile_context>

<pallas_src>
import functools

import jax
import jax.numpy as jnp
from jax.experimental import pallas as pl
from jax.experimental.pallas import tpu as pltpu

LANES = 128
SUBLANES = 8


def _round_up(x, m):
    return ((x + m - 1) // m) * m


def _cdiv(a, b):
    return -(-a // b)


def _rpn_cls_loss_kernel(l0_ref, l1_ref, lbl_ref, nll_ref, cnt_ref):
    i = pl.program_id(1)

    # The output blocks stay resident across the "arbitrary" axis: use them
    # directly as (8, 128) accumulators (zeroed on the first step per core).
    @pl.when(i == 0)
    def _():
        nll_ref[...] = jnp.zeros_like(nll_ref)
        cnt_ref[...] = jnp.zeros_like(cnt_ref)

    l0 = l0_ref[...].astype(jnp.float32)      # (TILE_R, 128)
    l1 = l1_ref[...].astype(jnp.float32)      # (TILE_R, 128)
    lbl = lbl_ref[...]                        # (TILE_R, 128), native dtype, -1 = ignore

    # 2-class log-softmax, fully elementwise (exp(-|d|) <= 1 so plain log is
    # numerically fine); one exp per anchor, no cross-lane reductions here.
    lse = jnp.maximum(l0, l1) + jnp.log(1.0 + jnp.exp(-jnp.abs(l0 - l1)))
    lp_true = jnp.where(lbl == 1, l1, l0) - lse           # (TILE_R, 128)
    mask = (lbl != -1).astype(jnp.float32)                # (TILE_R, 128)

    nll = -lp_true * mask
    r = nll.shape[0] // SUBLANES
    # Layout-preserving reshape (last two dims == one vreg) + vreg-add tree.
    nll_ref[...] += jnp.sum(nll.reshape(r, SUBLANES, LANES), axis=0)
    cnt_ref[...] += jnp.sum(mask.reshape(r, SUBLANES, LANES), axis=0)


@functools.partial(jax.jit, static_argnames=("max_tile_rows", "core_split"))
def rpn_cls_loss(cls_input, cls_target, max_tile_rows=512, core_split=2):
    """cls_input: (1, N, 2) float; cls_target: (1, 1, N) labels in {-1, 0, 1}."""
    assert cls_input.shape[-1] == 2, "CTPN RPN classification head is 2-class"
    # Class deinterleave in the wrapper (single fused copy per slab); dtypes
    # are left untouched — bf16 logits are upcast inside the kernel.
    l0 = cls_input[0, :, 0]                     # (N,)
    l1 = cls_input[0, :, 1]                     # (N,)
    labels = cls_target[0, 0]                   # (N,), native dtype

    n = l0.shape[0]
    rows = _cdiv(n, LANES)
    rows_per_core = _cdiv(rows, core_split)
    tile_r = min(max_tile_rows, _round_up(rows_per_core, SUBLANES))
    steps = _cdiv(rows_per_core, tile_r)
    rows_pad = core_split * steps * tile_r
    n_pad = rows_pad * LANES

    if n_pad != n:
        pad = n_pad - n
        l0 = jnp.pad(l0, (0, pad))
        l1 = jnp.pad(l1, (0, pad))
        labels = jnp.pad(labels, (0, pad), constant_values=-1)   # ignored anchors

    l0 = l0.reshape(rows_pad, LANES)
    l1 = l1.reshape(rows_pad, LANES)
    labels = labels.reshape(rows_pad, LANES)

    in_map = lambda c, i: (c * steps + i, 0)
    out_map = lambda c, i: (c, 0, 0)

    nll_p, cnt_p = pl.pallas_call(
        _rpn_cls_loss_kernel,
        out_shape=(
            jax.ShapeDtypeStruct((core_split, SUBLANES, LANES), jnp.float32),
            jax.ShapeDtypeStruct((core_split, SUBLANES, LANES), jnp.float32),
        ),
        grid_spec=pltpu.PrefetchScalarGridSpec(
            num_scalar_prefetch=0,
            grid=(core_split, steps),
            in_specs=[
                pl.BlockSpec((tile_r, LANES), in_map),
                pl.BlockSpec((tile_r, LANES), in_map),
                pl.BlockSpec((tile_r, LANES), in_map),
            ],
            out_specs=[
                pl.BlockSpec((None, SUBLANES, LANES), out_map),
                pl.BlockSpec((None, SUBLANES, LANES), out_map),
            ],
        ),
        compiler_params=pltpu.CompilerParams(
            dimension_semantics=("parallel", "arbitrary"),
        ),
    )(l0, l1, labels)

    total = jnp.sum(nll_p)
    count = jnp.sum(cnt_p)
    # NaN when no kept anchor (0/0) — matches torch.nll_loss mean-over-empty
    # followed by clamp in the original module.
    loss = total / count
    return jnp.clip(loss, 0.0, 10.0)


def _reference(cls_input, cls_target):
    # pure-JAX reference of the same PyTorch semantics (for a sanity check)
    y_true = cls_target[0, 0]
    keep = y_true != -1
    logits = cls_input[0].astype(jnp.float32)
    logp = jax.nn.log_softmax(logits, axis=-1)
    lbl = jnp.where(keep, y_true.astype(jnp.int32), 0)
    lp_true = jnp.take_along_axis(logp, lbl[:, None], axis=-1)[:, 0]
    loss = jnp.sum(-lp_true * keep) / jnp.sum(keep)
    return jnp.clip(loss, 0.0, 10.0)


if __name__ == "__main__":
    # Small, CTPN-consistent shapes: 1 image, N anchors, 2 classes (bg / text).
    N, C = 256, 2
    key = jax.random.PRNGKey(0)
    k_logits, k_labels = jax.random.split(key)

    cls_input = jax.random.normal(k_logits, (1, N, C), dtype=jnp.float32)
    # labels in {-1, 0, 1}: -1 = ignore, 0/1 = class indices (float, like torch targets)
    cls_target = jax.random.randint(k_labels, (1, 1, N), -1, 2).astype(jnp.float32)

    loss = jax.block_until_ready(rpn_cls_loss(cls_input, cls_target))
    ref = jax.block_until_ready(_reference(cls_input, cls_target))

    assert jnp.allclose(loss, ref, rtol=1e-5, atol=1e-5), (loss, ref)
    print("KERNEL_OK")
</pallas_src>

<mosaic_0001>
module attributes {stable_mosaic.version = 11 : i64} {
  func.func @_rpn_cls_loss_kernel(%arg0: i32, %arg1: i32, %arg2: memref<8x128xf32, #tpu.memory_space<vmem>>, %arg3: memref<8x128xf32, #tpu.memory_space<vmem>>, %arg4: memref<8x128xf32, #tpu.memory_space<vmem>>, %arg5: memref<1x8x128xf32, #tpu.memory_space<vmem>>, %arg6: memref<1x8x128xf32, #tpu.memory_space<vmem>>) attributes {dimension_semantics = [#tpu.dimension_semantics<parallel>, #tpu.dimension_semantics<arbitrary>], iteration_bounds = array<i64: 2, 1>, scalar_prefetch = 0 : i64, scratch_operands = 0 : i64, tpu.core_type = #tpu.core_type<tc>, window_params = [{transform_indices = @transform_0, window_bounds = array<i64: 8, 128>}, {transform_indices = @transform_1, window_bounds = array<i64: 8, 128>}, {transform_indices = @transform_2, window_bounds = array<i64: 8, 128>}, {transform_indices = @transform_3, window_bounds = array<i64: 1, 8, 128>}, {transform_indices = @transform_4, window_bounds = array<i64: 1, 8, 128>}]} {
    %c0_i32 = arith.constant 0 : i32
    %0 = arith.cmpi eq, %arg1, %c0_i32 : i32
    %1 = arith.extui %0 : i1 to i32
    %c0_i32_0 = arith.constant 0 : i32
    %2 = arith.cmpi ne, %1, %c0_i32_0 : i32
    scf.if %2 {
      %cst_24 = arith.constant 0.000000e+00 : f32
      %43 = vector.broadcast %cst_24 : f32 to vector<8x128xf32>
      %c0_25 = arith.constant 0 : index
      %c0_26 = arith.constant 0 : index
      %c0_27 = arith.constant 0 : index
      %44 = vector.load %arg5[%c0_25, %c0_26, %c0_27] : memref<1x8x128xf32, #tpu.memory_space<vmem>>, vector<1x8x128xf32>
      %45 = vector.shape_cast %44 : vector<1x8x128xf32> to vector<8x128xf32>
      %46 = vector.shape_cast %43 : vector<8x128xf32> to vector<1x8x128xf32>
      tpu.vector_store %arg5[%c0_25, %c0_26, %c0_27], %46 {strides = array<i32>} : memref<1x8x128xf32, #tpu.memory_space<vmem>>, vector<1x8x128xf32>,
      %cst_28 = arith.constant 0.000000e+00 : f32
      %47 = vector.broadcast %cst_28 : f32 to vector<8x128xf32>
      %c0_29 = arith.constant 0 : index
      %c0_30 = arith.constant 0 : index
      %c0_31 = arith.constant 0 : index
      %48 = vector.load %arg6[%c0_29, %c0_30, %c0_31] : memref<1x8x128xf32, #tpu.memory_space<vmem>>, vector<1x8x128xf32>
      %49 = vector.shape_cast %48 : vector<1x8x128xf32> to vector<8x128xf32>
      %50 = vector.shape_cast %47 : vector<8x128xf32> to vector<1x8x128xf32>
      tpu.vector_store %arg6[%c0_29, %c0_30, %c0_31], %50 {strides = array<i32>} : memref<1x8x128xf32, #tpu.memory_space<vmem>>, vector<1x8x128xf32>,
    } else {
    }
    %c0 = arith.constant 0 : index
    %c0_1 = arith.constant 0 : index
    %3 = vector.load %arg2[%c0, %c0_1] : memref<8x128xf32, #tpu.memory_space<vmem>>, vector<8x128xf32>
    %c0_2 = arith.constant 0 : index
    %c0_3 = arith.constant 0 : index
    %4 = vector.load %arg3[%c0_2, %c0_3] : memref<8x128xf32, #tpu.memory_space<vmem>>, vector<8x128xf32>
    %c0_4 = arith.constant 0 : index
    %c0_5 = arith.constant 0 : index
    %5 = vector.load %arg4[%c0_4, %c0_5] : memref<8x128xf32, #tpu.memory_space<vmem>>, vector<8x128xf32>
    %6 = arith.maximumf %3, %4 : vector<8x128xf32>
    %7 = arith.subf %3, %4 : vector<8x128xf32>
    %8 = math.absf %7 : vector<8x128xf32>
    %cst = arith.constant 0.000000e+00 : f32
    %9 = vector.broadcast %cst : f32 to vector<8x128xf32>
    %10 = arith.subf %9, %8 : vector<8x128xf32>
    %11 = math.exp %10 : vector<8x128xf32>
    %cst_6 = arith.constant 1.000000e+00 : f32
    %12 = vector.broadcast %cst_6 : f32 to vector<8x128xf32>
    %13 = arith.addf %12, %11 : vector<8x128xf32>
    %14 = math.log %13 : vector<8x128xf32>
    %15 = arith.addf %6, %14 : vector<8x128xf32>
    %cst_7 = arith.constant 1.000000e+00 : f32
    %16 = vector.broadcast %cst_7 : f32 to vector<8x128xf32>
    %17 = arith.cmpf oeq, %5, %16 : vector<8x128xf32>
    %18 = arith.select %17, %4, %3 : vector<8x128xi1>, vector<8x128xf32>
    %19 = arith.subf %18, %15 : vector<8x128xf32>
    %cst_8 = arith.constant -1.000000e+00 : f32
    %20 = vector.broadcast %cst_8 : f32 to vector<8x128xf32>
    %21 = arith.cmpf one, %5, %20 : vector<8x128xf32>
    %22 = arith.extui %21 : vector<8x128xi1> to vector<8x128xi32>
    %23 = arith.sitofp %22 : vector<8x128xi32> to vector<8x128xf32>
    %cst_9 = arith.constant 0.000000e+00 : f32
    %24 = vector.broadcast %cst_9 : f32 to vector<8x128xf32>
    %25 = arith.subf %24, %19 : vector<8x128xf32>
    %26 = arith.mulf %25, %23 : vector<8x128xf32>
    %c0_10 = arith.constant 0 : index
    %c0_11 = arith.constant 0 : index
    %c0_12 = arith.constant 0 : index
    %27 = vector.load %arg5[%c0_10, %c0_11, %c0_12] : memref<1x8x128xf32, #tpu.memory_space<vmem>>, vector<1x8x128xf32>
    %28 = vector.shape_cast %27 : vector<1x8x128xf32> to vector<8x128xf32>
    %29 = vector.shape_cast %26 : vector<8x128xf32> to vector<1x8x128xf32>
    %cst_13 = arith.constant dense<0.000000e+00> : vector<8x128xf32>
    %30 = vector.multi_reduction <add>, %29, %cst_13 [0] : vector<1x8x128xf32> to vector<8x128xf32>
    %31 = arith.addf %28, %30 : vector<8x128xf32>
    %c0_14 = arith.constant 0 : index
    %c0_15 = arith.constant 0 : index
    %c0_16 = arith.constant 0 : index
    %32 = vector.load %arg5[%c0_14, %c0_15, %c0_16] : memref<1x8x128xf32, #tpu.memory_space<vmem>>, vector<1x8x128xf32>
    %33 = vector.shape_cast %32 : vector<1x8x128xf32> to vector<8x128xf32>
    %34 = vector.shape_cast %31 : vector<8x128xf32> to vector<1x8x128xf32>
    tpu.vector_store %arg5[%c0_14, %c0_15, %c0_16], %34 {strides = array<i32>} : memref<1x8x128xf32, #tpu.memory_space<vmem>>, vector<1x8x128xf32>,
    %c0_17 = arith.constant 0 : index
    %c0_18 = arith.constant 0 : index
    %c0_19 = arith.constant 0 : index
    %35 = vector.load %arg6[%c0_17, %c0_18, %c0_19] : memref<1x8x128xf32, #tpu.memory_space<vmem>>, vector<1x8x128xf32>
    %36 = vector.shape_cast %35 : vector<1x8x128xf32> to vector<8x128xf32>
    %37 = vector.shape_cast %23 : vector<8x128xf32> to vector<1x8x128xf32>
    %cst_20 = arith.constant dense<0.000000e+00> : vector<8x128xf32>
    %38 = vector.multi_reduction <add>, %37, %cst_20 [0] : vector<1x8x128xf32> to vector<8x128xf32>
    %39 = arith.addf %36, %38 : vector<8x128xf32>
    %c0_21 = arith.constant 0 : index
    %c0_22 = arith.constant 0 : index
    %c0_23 = arith.constant 0 : index
    %40 = vector.load %arg6[%c0_21, %c0_22, %c0_23] : memref<1x8x128xf32, #tpu.memory_space<vmem>>, vector<1x8x128xf32>
    %41 = vector.shape_cast %40 : vector<1x8x128xf32> to vector<8x128xf32>
    %42 = vector.shape_cast %39 : vector<8x128xf32> to vector<1x8x128xf32>
    tpu.vector_store %arg6[%c0_21, %c0_22, %c0_23], %42 {strides = array<i32>} : memref<1x8x128xf32, #tpu.memory_space<vmem>>, vector<1x8x128xf32>,
    return
  }
  func.func @transform_0(%arg0: i32, %arg1: i32) -> (i32, i32) {
    %c1_i32 = arith.constant 1 : i32
    %0 = arith.muli %arg0, %c1_i32 : i32
    %1 = arith.addi %0, %arg1 : i32
    %c0_i32 = arith.constant 0 : i32
    %c0_i32_0 = arith.constant 0 : i32
    return %1, %c0_i32 : i32, i32
  }
  func.func @transform_1(%arg0: i32, %arg1: i32) -> (i32, i32) {
    %c1_i32 = arith.constant 1 : i32
    %0 = arith.muli %arg0, %c1_i32 : i32
    %1 = arith.addi %0, %arg1 : i32
    %c0_i32 = arith.constant 0 : i32
    %c0_i32_0 = arith.constant 0 : i32
    return %1, %c0_i32 : i32, i32
  }
  func.func @transform_2(%arg0: i32, %arg1: i32) -> (i32, i32) {
    %c1_i32 = arith.constant 1 : i32
    %0 = arith.muli %arg0, %c1_i32 : i32
    %1 = arith.addi %0, %arg1 : i32
    %c0_i32 = arith.constant 0 : i32
    %c0_i32_0 = arith.constant 0 : i32
    return %1, %c0_i32 : i32, i32
  }
  func.func @transform_3(%arg0: i32, %arg1: i32) -> (i32, i32, i32) {
    %c0_i32 = arith.constant 0 : i32
    %c0_i32_0 = arith.constant 0 : i32
    %c0_i32_1 = arith.constant 0 : i32
    return %arg0, %c0_i32, %c0_i32_0 : i32, i32, i32
  }
  func.func @transform_4(%arg0: i32, %arg1: i32) -> (i32, i32, i32) {
    %c0_i32 = arith.constant 0 : i32
    %c0_i32_0 = arith.constant 0 : i32
    %c0_i32_1 = arith.constant 0 : i32
    return %arg0, %c0_i32, %c0_i32_0 : i32, i32, i32
  }
}

</mosaic_0001>

<llo_original>
// kernel: rpn_cls_loss.1
$region0: #{rpn_cls_loss.1}
  #allocation0 [shape = 'u32[]', space=smem, size = 0x4, offset = 0x4, fixed_abs, tag = 'smem constant byte address 0x4 - core index']
  #allocation1 [shape = 'u32[144,128]{1,0:T(1,128)}', space=vmem, size = 0x12000, scoped, tag = 'internal scratch']
  %s0 = inlined_call_operand.vmem [shape: f32[16,128], index: 0, kind: input, shape index: {}]
  %s1 = inlined_call_operand.vmem [shape: f32[16,128], index: 1, kind: input, shape index: {}]
  %s2 = inlined_call_operand.vmem [shape: f32[16,128], index: 2, kind: input, shape index: {}]
  %s3 = inlined_call_operand.vmem [shape: f32[2,8,128], index: 3, kind: output, shape index: {0}]
  %s4 = inlined_call_operand.vmem [shape: f32[2,8,128], index: 4, kind: output, shape index: {1}]
  %5 = xla_tuple %s3, %s4
  %s6 = sld [smem:[#allocation0]]
  $region57: #{rpn_cls_loss.1} parent=0
    _
  %s8 = ssub.s32 1, %s6
  %s9 = scalar_select 0, %s8, %s6
  loop: start=0, step=1, limit=4
  $region2: #{rpn_cls_loss.1} parent=0 // loop_pre_header
    _
  $region3: #{rpn_cls_loss.1} parent=0 // loop_header
    %s11 = sphi 0, %s15
    %p12 = scmp.ge.s32.totalorder %s11, 4
    %s18 = sphi 0, %s30
    %s19 = sphi 0, %s26
    %s20 = sphi 0, %s18
    %s21 = sphi 0, %s19
    %s22 = sphi 0, %s20
    %s23 = sphi 0, %s21
    %s35 = sphi 0, %s37
    %s38 = sphi 0, %s35
    %s39 = sphi 0, %s38
    %s55 = sphi 0, %s39
    %s63 = sphi 0, %s65
    %s66 = sphi 0, %s63
    %s67 = sphi 0, %s66
    %s83 = sphi 0, %s67
    %s91 = sphi 0, %s93
    %s94 = sphi 0, %s91
    %s95 = sphi 0, %s94
    %s111 = sphi 0, %s95
    %s117 = sphi 0, %s119
    %s120 = sphi 0, %s117
    %s121 = sphi 0, %s120
    %s137 = sphi 0, %s121
    %s143 = sphi 0, %s145
    %s146 = sphi 0, %s143
    %s147 = sphi 0, %s146
    %s163 = sphi 0, %s147
  $region4: #{rpn_cls_loss.1} parent=0 // loop_header_branch
    %14 = sbr.rel (%p12) target = $region8
  $region5: #{rpn_cls_loss.1} parent=0 // loop_body
    %s16 = ssub.s32 %s11, 1
    %s17 = ssub.s32 %s11, 2
    %s24 = sadd.s32 1, %s19
    %p25 = scmp.ge.s32.totalorder %s24, 1
    %s26 = scalar_select %p25, 0, %s24
    %s27 = sadd.s32 1, %s18
    %s28 = scalar_select %p25, %s27, %s18
    %p29 = scmp.ge.s32.totalorder %s28, 2
    %s30 = scalar_select %p29, 0, %s28
    %s31 = sadd.s32 %s18, %s19
    %s32 = sadd.s32 %s30, %s26
    %s33 = ssub.s32 %s31, %s32
    %p34 = scmp.eq.s32.totalorder %s33, 0
    %s36 = sadd.s32 %s35, 1
    %s37 = scalar_select %p34, %s35, %s36
    %p40 = pneg %p34
    %p41 = scmp.eq.s32.totalorder %s11, 1
    %p42 = por %p40, %p41
    %p43 = scmp.ne.s32.totalorder %s35, %s38
    %p44 = scmp.eq.s32.totalorder %s11, 0
    %p45 = por %p43, %p44
    %p46 = scmp.ne.s32.totalorder %s35, %s38
    %p47 = scmp.eq.s32.totalorder %s16, 1
    %p48 = por %p46, %p47
    %p49 = scmp.ne.s32.totalorder %s38, %s39
    %p50 = scmp.eq.s32.totalorder %s16, 0
    %p51 = por %p49, %p50
    %p52 = scmp.ne.s32.totalorder %s38, %s39
    %p53 = scmp.eq.s32.totalorder %s17, 1
    %p54 = por %p52, %p53
    %p56 = scmp.ne.s32.totalorder %s39, %s55
    %p57 = scmp.eq.s32.totalorder %s17, 0
    %p58 = por %p56, %p57
    %s59 = sadd.s32 %s18, %s19
    %s60 = sadd.s32 %s30, %s26
    %s61 = ssub.s32 %s59, %s60
    %p62 = scmp.eq.s32.totalorder %s61, 0
    %s64 = sadd.s32 %s63, 1
    %s65 = scalar_select %p62, %s63, %s64
    %p68 = pneg %p62
    %p69 = scmp.eq.s32.totalorder %s11, 1
    %p70 = por %p68, %p69
    %p71 = scmp.ne.s32.totalorder %s63, %s66
    %p72 = scmp.eq.s32.totalorder %s11, 0
    %p73 = por %p71, %p72
    %p74 = scmp.ne.s32.totalorder %s63, %s66
    %p75 = scmp.eq.s32.totalorder %s16, 1
    %p76 = por %p74, %p75
    %p77 = scmp.ne.s32.totalorder %s66, %s67
    %p78 = scmp.eq.s32.totalorder %s16, 0
    %p79 = por %p77, %p78
    %p80 = scmp.ne.s32.totalorder %s66, %s67
    %p81 = scmp.eq.s32.totalorder %s17, 1
    %p82 = por %p80, %p81
    %p84 = scmp.ne.s32.totalorder %s67, %s83
    %p85 = scmp.eq.s32.totalorder %s17, 0
    %p86 = por %p84, %p85
    %s87 = sadd.s32 %s18, %s19
    %s88 = sadd.s32 %s30, %s26
    %s89 = ssub.s32 %s87, %s88
    %p90 = scmp.eq.s32.totalorder %s89, 0
    %s92 = sadd.s32 %s91, 1
    %s93 = scalar_select %p90, %s91, %s92
    %p96 = pneg %p90
    %p97 = scmp.eq.s32.totalorder %s11, 1
    %p98 = por %p96, %p97
    %p99 = scmp.ne.s32.totalorder %s91, %s94
    %p100 = scmp.eq.s32.totalorder %s11, 0
    %p101 = por %p99, %p100
    %p102 = scmp.ne.s32.totalorder %s91, %s94
    %p103 = scmp.eq.s32.totalorder %s16, 1
    %p104 = por %p102, %p103
    %p105 = scmp.ne.s32.totalorder %s94, %s95
    %p106 = scmp.eq.s32.totalorder %s16, 0
    %p107 = por %p105, %p106
    %p108 = scmp.ne.s32.totalorder %s94, %s95
    %p109 = scmp.eq.s32.totalorder %s17, 1
    %p110 = por %p108, %p109
    %p112 = scmp.ne.s32.totalorder %s95, %s111
    %p113 = scmp.eq.s32.totalorder %s17, 0
    %p114 = por %p112, %p113
    %s115 = ssub.s32 %s18, %s30
    %p116 = scmp.eq.s32.totalorder %s115, 0
    %s118 = sadd.s32 %s117, 1
    %s119 = scalar_select %p116, %s117, %s118
    %p122 = pneg %p116
    %p123 = scmp.eq.s32.totalorder %s11, 1
    %p124 = por %p122, %p123
    %p125 = scmp.ne.s32.totalorder %s117, %s120
    %p126 = scmp.eq.s32.totalorder %s11, 0
    %p127 = por %p125, %p126
    %p128 = scmp.ne.s32.totalorder %s117, %s120
    %p129 = scmp.eq.s32.totalorder %s16, 1
    %p130 = por %p128, %p129
    %p131 = scmp.ne.s32.totalorder %s120, %s121
    %p132 = scmp.eq.s32.totalorder %s16, 0
    %p133 = por %p131, %p132
    %p134 = scmp.ne.s32.totalorder %s120, %s121
    %p135 = scmp.eq.s32.totalorder %s17, 1
    %p136 = por %p134, %p135
    %p138 = scmp.ne.s32.totalorder %s121, %s137
    %p139 = scmp.eq.s32.totalorder %s17, 0
    %p140 = por %p138, %p139
    %s141 = ssub.s32 %s18, %s30
    %p142 = scmp.eq.s32.totalorder %s141, 0
    %s144 = sadd.s32 %s143, 1
    %s145 = scalar_select %p142, %s143, %s144
    %p148 = pneg %p142
    %p149 = scmp.eq.s32.totalorder %s11, 1
    %p150 = por %p148, %p149
    %p151 = scmp.ne.s32.totalorder %s143, %s146
    %p152 = scmp.eq.s32.totalorder %s11, 0
    %p153 = por %p151, %p152
    %p154 = scmp.ne.s32.totalorder %s143, %s146
    %p155 = scmp.eq.s32.totalorder %s16, 1
    %p156 = por %p154, %p155
    %p157 = scmp.ne.s32.totalorder %s146, %s147
    %p158 = scmp.eq.s32.totalorder %s16, 0
    %p159 = por %p157, %p158
    %p160 = scmp.ne.s32.totalorder %s146, %s147
    %p161 = scmp.eq.s32.totalorder %s17, 1
    %p162 = por %p160, %p161
    %p164 = scmp.ne.s32.totalorder %s147, %s163
    %p165 = scmp.eq.s32.totalorder %s17, 0
    %p166 = por %p164, %p165
    %p167 = scmp.le.s32.totalorder 1, %s11
    %p168 = scmp.lt.s32.totalorder %s11, 3
    %p169 = pnand %p167, %p168
    %p170 = pneg %p169
    // Predicated region
    $region9: #{rpn_cls_loss.1} parent=5 // pred_check
      _
    $region10: #{rpn_cls_loss.1} parent=5 // pred_check_branch
      %172 = sbr.rel (%p169) target = $region12
    $region11: #{rpn_cls_loss.1} parent=5 // pred_region
      %s173 = ssub.s32 %s11, 1
    $region12: #{rpn_cls_loss.1} parent=5 // pred_fallthru
      _
    %p174 = scmp.lt.s32.totalorder %s11, 2
    // Predicated region
    $region13: #{rpn_cls_loss.1} parent=5 // pred_check
      %p175 = pneg %p174
    $region14: #{rpn_cls_loss.1} parent=5 // pred_check_branch
      %177 = sbr.rel (%p175) target = $region16
    $region15: #{rpn_cls_loss.1} parent=5 // pred_region
      // Predicated region
      $region17: #{rpn_cls_loss.1} parent=15 // pred_check
        %p178 = pneg %p45
      $region18: #{rpn_cls_loss.1} parent=15 // pred_check_branch
        %180 = sbr.rel (%p178) target = $region20
      $region19: #{rpn_cls_loss.1} parent=15 // pred_region
        %s181 = sadd.s32 %s18, %s19
        %p182 = scmp.lt.s32.totalorder %s181, 1
        %s183 = scalar_select %p182, %s181, 1
        %s184 = smul.addr %s183, 8
        %s185 = scalar_lea.vmem %s0, %s184
        %s186 = sadd.s32 %s18, %s19
      $region20: #{rpn_cls_loss.1} parent=15 // pred_fallthru
        _
      // Predicated region
      $region21: #{rpn_cls_loss.1} parent=15 // pred_check
        %p187 = pneg %p73
      $region22: #{rpn_cls_loss.1} parent=15 // pred_check_branch
        %189 = sbr.rel (%p187) target = $region24
      $region23: #{rpn_cls_loss.1} parent=15 // pred_region
        %s190 = sadd.s32 %s18, %s19
        %p191 = scmp.lt.s32.totalorder %s190, 1
        %s192 = scalar_select %p191, %s190, 1
        %s193 = smul.addr %s192, 8
        %s194 = scalar_lea.vmem %s1, %s193
        %s195 = sadd.s32 %s18, %s19
      $region24: #{rpn_cls_loss.1} parent=15 // pred_fallthru
        _
      // Predicated region
      $region25: #{rpn_cls_loss.1} parent=15 // pred_check
        %p196 = pneg %p101
      $region26: #{rpn_cls_loss.1} parent=15 // pred_check_branch
        %198 = sbr.rel (%p196) target = $region28
      $region27: #{rpn_cls_loss.1} parent=15 // pred_region
        %s199 = sadd.s32 %s18, %s19
        %p200 = scmp.lt.s32.totalorder %s199, 1
        %s201 = scalar_select %p200, %s199, 1
        %s202 = smul.addr %s201, 8
        %s203 = scalar_lea.vmem %s2, %s202
        %s204 = sadd.s32 %s18, %s19
      $region28: #{rpn_cls_loss.1} parent=15 // pred_fallthru
        _
    $region16: #{rpn_cls_loss.1} parent=5 // pred_fallthru
      _
    %p205 = scmp.le.s32.totalorder 1, %s11
    %p206 = scmp.lt.s32.totalorder %s11, 3
    %p207 = pnand %p205, %p206
    %p208 = pneg %p207
    // Predicated region
    $region29: #{rpn_cls_loss.1} parent=5 // pred_check
      _
    $region30: #{rpn_cls_loss.1} parent=5 // pred_check_branch
      %210 = sbr.rel (%p207) target = $region32
    $region31: #{rpn_cls_loss.1} parent=5 // pred_region
      %s211 = ssub.s32 %s11, 1
      %s212 = sadd.s32 %s20, %s21
      %p213 = scmp.lt.s32.totalorder %s212, 1
      %s214 = scalar_select %p213, %s212, 1
      %s215 = smul.addr %s214, 8
      %s216 = scalar_lea.vmem %s0, %s215
      %p217 = pneg %p51
      %p218 = pneg %p48
      %s219 = sadd.s32 %s20, %s21
      %p220 = scmp.lt.s32.totalorder %s219, 1
      %s221 = scalar_select %p220, %s219, 1
      %s222 = smul.addr %s221, 8
      %s223 = scalar_lea.vmem %s1, %s222
      %p224 = pneg %p79
      %p225 = pneg %p76
      %s226 = sadd.s32 %s20, %s21
      %p227 = scmp.lt.s32.totalorder %s226, 1
      %s228 = scalar_select %p227, %s226, 1
      %s229 = smul.addr %s228, 8
      %s230 = scalar_lea.vmem %s2, %s229
      %p231 = pneg %p107
      %p232 = pneg %p104
      %p233 = pneg %p133
      %p234 = pneg %p130
      %p235 = scmp.lt.s32.totalorder %s20, 1
      %s236 = scalar_select %p235, %s20, 1
      %s237 = smul.addr %s236, 8
      %s238 = scalar_lea.vmem %s3, %s237
      %p239 = pneg %p159
      %p240 = pneg %p156
      %p241 = scmp.lt.s32.totalorder %s20, 1
      %s242 = scalar_select %p241, %s20, 1
      %s243 = smul.addr %s242, 8
      %s244 = scalar_lea.vmem %s4, %s243
      %s245 = sadd.s32 %s20, %s21
      %p246 = scmp.lt.s32.totalorder %s245, 1
      %s247 = scalar_select %p246, %s245, 1
      %s248 = smul.addr %s247, 8
      %s249 = scalar_lea.vmem %s0, %s248
      %s250 = sadd.s32 %s20, %s21
      %s251 = sadd.s32 %s20, %s21
      %p252 = scmp.lt.s32.totalorder %s251, 1
      %s253 = scalar_select %p252, %s251, 1
      %s254 = smul.addr %s253, 8
      %s255 = scalar_lea.vmem %s1, %s254
      %s256 = sadd.s32 %s20, %s21
      %s257 = sadd.s32 %s20, %s21
      %p258 = scmp.lt.s32.totalorder %s257, 1
      %s259 = scalar_select %p258, %s257, 1
      %s260 = smul.addr %s259, 8
      %s261 = scalar_lea.vmem %s2, %s260
      %s262 = sadd.s32 %s20, %s21
      %p263 = scmp.lt.s32.totalorder %s20, 1
      %s264 = scalar_select %p263, %s20, 1
      %s265 = smul.addr %s264, 8
      %s266 = scalar_lea.vmem %s3, %s265
      %p267 = scmp.lt.s32.totalorder %s20, 1
      %s268 = scalar_select %p267, %s20, 1
      %s269 = smul.addr %s268, 8
      %s270 = scalar_lea.vmem %s4, %s269
      %p271 = scmp.eq.s32.totalorder %s21, 0
      // Predicated region
      $region33: #{rpn_cls_loss.1} parent=31 // pred_check
        %p272 = pneg %p271
      $region34: #{rpn_cls_loss.1} parent=31 // pred_check_branch
        %274 = sbr.rel (%p272) target = $region36
      $region35: #{rpn_cls_loss.1} parent=31 // pred_region
        %275 = vst [vmem:[%s266] sm:$0xff] 0.0
        %276 = vst [vmem:[%s270] sm:$0xff] 0.0
      $region36: #{rpn_cls_loss.1} parent=31 // pred_fallthru
        _
      %v277 = vld [vmem:[%s249] sm:$0xff]
      %v278 = vld [vmem:[%s255] sm:$0xff]
      %v279 = vld [vmem:[%s261] sm:$0xff]
      %v280 = vmax.f32 %v277, %v278
      %v281 = vsub.f32 %v277, %v278
      %v282 = vand.u32 2147483647, %v281
      %v283 = vsub.f32 0.0, %v282
      %v284 = vmul.f32 %v283, 1.442695
      %v285 = vpow.pop %v284
      %v286 = vadd.f32 %v285, 1.0
      %v287 = vlog2.pop %v286
      %v288 = vmul.f32 %v287, 0.6931472
      %v289 = vadd.f32 %v280, %v288
      %vm290 = vcmp.eq.f32.partialorder %v279, 1.0
      %v291 = vsel %vm290, %v278, %v277
      %v292 = vsub.f32 %v291, %v289
      %vm293 = vcmp.ne.f32.partialorder %v279, -1.0
      %v294 = vsel %vm293, 1, 0
      %v295 = vcvt.s32.f32 %v294
      %v296 = vsub.f32 0.0, %v292
      %v297 = vmul.f32 %v296, %v295
      %v298 = vld [vmem:[%s266] sm:$0xff]
      %v299 = vadd.f32 %v297, 0.0
      %v300 = vadd.f32 %v298, %v299
      %301 = vst [vmem:[%s266] sm:$0xff] %v300
      %v302 = vld [vmem:[%s270] sm:$0xff]
      %v303 = vadd.f32 %v295, 0.0
      %v304 = vadd.f32 %v302, %v303
      %305 = vst [vmem:[%s270] sm:$0xff] %v304
      %p306 = scmp.lt.s32.totalorder %s20, 1
      %s307 = scalar_select %p306, %s20, 1
      %s308 = smul.addr %s307, 8
      %s309 = scalar_lea.vmem %s3, %s308
      %p310 = scmp.lt.s32.totalorder %s20, 1
      %s311 = scalar_select %p310, %s20, 1
      %s312 = smul.addr %s311, 8
      %s313 = scalar_lea.vmem %s4, %s312
      // Predicated region
      $region37: #{rpn_cls_loss.1} parent=31 // pred_check
        %p314 = pneg %p130
      $region38: #{rpn_cls_loss.1} parent=31 // pred_check_branch
        %316 = sbr.rel (%p314) target = $region40
      $region39: #{rpn_cls_loss.1} parent=31 // pred_region
        _
      $region40: #{rpn_cls_loss.1} parent=31 // pred_fallthru
        _
      // Predicated region
      $region41: #{rpn_cls_loss.1} parent=31 // pred_check
        %p317 = pneg %p156
      $region42: #{rpn_cls_loss.1} parent=31 // pred_check_branch
        %319 = sbr.rel (%p317) target = $region44
      $region43: #{rpn_cls_loss.1} parent=31 // pred_region
        _
      $region44: #{rpn_cls_loss.1} parent=31 // pred_fallthru
        _
    $region32: #{rpn_cls_loss.1} parent=5 // pred_fallthru
      _
    %p320 = scmp.le.s32.totalorder 2, %s11
    // Predicated region
    $region45: #{rpn_cls_loss.1} parent=5 // pred_check
      %p321 = pneg %p320
    $region46: #{rpn_cls_loss.1} parent=5 // pred_check_branch
      %323 = sbr.rel (%p321) target = $region48
    $region47: #{rpn_cls_loss.1} parent=5 // pred_region
      %s324 = ssub.s32 %s11, 2
      // Predicated region
      $region49: #{rpn_cls_loss.1} parent=47 // pred_check
        %p325 = pneg %p136
      $region50: #{rpn_cls_loss.1} parent=47 // pred_check_branch
        %327 = sbr.rel (%p325) target = $region52
      $region51: #{rpn_cls_loss.1} parent=47 // pred_region
        %p328 = scmp.lt.s32.totalorder %s22, 1
        %s329 = scalar_select %p328, %s22, 1
        %s330 = smul.addr %s329, 8
        %s331 = scalar_lea.vmem %s3, %s330
      $region52: #{rpn_cls_loss.1} parent=47 // pred_fallthru
        _
      // Predicated region
      $region53: #{rpn_cls_loss.1} parent=47 // pred_check
        %p332 = pneg %p162
      $region54: #{rpn_cls_loss.1} parent=47 // pred_check_branch
        %334 = sbr.rel (%p332) target = $region56
      $region55: #{rpn_cls_loss.1} parent=47 // pred_region
        %p335 = scmp.lt.s32.totalorder %s22, 1
        %s336 = scalar_select %p335, %s22, 1
        %s337 = smul.addr %s336, 8
        %s338 = scalar_lea.vmem %s4, %s337
      $region56: #{rpn_cls_loss.1} parent=47 // pred_fallthru
        _
    $region48: #{rpn_cls_loss.1} parent=5 // pred_fallthru
      _
  $region6: #{rpn_cls_loss.1} parent=0 // loop_footer
    %s15 = sadd.s32 1, %s11
  $region7: #{rpn_cls_loss.1} parent=0 // loop_footer_branch
    %10 = sbr.rel target = $region3
  $region8: #{rpn_cls_loss.1} parent=0 // loop_exit
    _

</llo_original>
